<compile_context>
chip_gen: v5e
topology: v5e:2x2
jax: 0.10.0
libtpu: 0.0.40
codegen_flags: <defaults>
</compile_context>

<pallas_src>
import functools

import jax
import jax.numpy as jnp
from jax.experimental import pallas as pl
from jax.experimental.pallas import tpu as pltpu


def _round_up(x, m):
    return ((x + m - 1) // m) * m


def _vmem_capacity_bytes():
    """Physical VMEM size; conservative (v7x-sized) fallback if the query fails."""
    try:
        info = pltpu.get_tpu_info()
        cap = getattr(info, "vmem_capacity_bytes", None)
        if cap:
            return int(cap)
    except Exception:
        pass
    return 64 * 1024 * 1024


# ---------------------------------------------------------------------------
# Parameter prep (run ONCE, not per forward call)
# ---------------------------------------------------------------------------
def fold_adapter_params(wd, bd, wm, bm, wu, bu):
    """Eval-mode algebraic fold: down . mid is a single affine map (no nonlinearity,
    dropout == identity), so  Wd' = Wd @ Wm,  bd' = bd @ Wm + bm.
    Also zero-pads the hidden dim H to a multiple of 128 (lane-dense MXU tiles).
    Returns (wd_eff, bd_eff, wu_p, bu) ready to feed bi_direct_adapter()."""
    f32 = jnp.float32
    wd_eff = jnp.dot(wd.astype(f32), wm.astype(f32)).astype(wd.dtype)                     # (C, H)
    bd_eff = (jnp.dot(bd.astype(f32), wm.astype(f32)) + bm.astype(f32)).astype(bd.dtype)  # (1, H)

    H = wd.shape[1]
    Hp = _round_up(H, 128)
    wu_p = wu
    if Hp != H:
        wd_eff = jnp.pad(wd_eff, ((0, 0), (0, Hp - H)))
        bd_eff = jnp.pad(bd_eff, ((0, 0), (0, Hp - H)))
        wu_p = jnp.pad(wu_p, ((0, Hp - H), (0, 0)))
    return wd_eff, bd_eff, wu_p, bu


# ---------------------------------------------------------------------------
# Kernel
# ---------------------------------------------------------------------------
def _adapter_kernel(x_ref, wd_ref, bd_ref, wu_ref, bu_ref, o_ref, *, add_residual):
    # x_ref : (tm, C)
    # wd_ref: (C, Hp)   bd_ref: (1, Hp)      (down folded with mid, eval mode)
    # wu_ref: (Hp, C)   bu_ref: (1, C)
    # Native-dtype operands straight into the MXU, f32 accumulation.
    h = jnp.dot(x_ref[...], wd_ref[...], preferred_element_type=jnp.float32)
    h = h + bd_ref[...].astype(jnp.float32)
    # dropout(p=0.1) -> identity in eval mode
    y = jnp.dot(h.astype(wu_ref.dtype), wu_ref[...], preferred_element_type=jnp.float32)
    y = y + bu_ref[...].astype(jnp.float32)
    if add_residual:
        y = y + x_ref[...].astype(jnp.float32)
    o_ref[...] = y.astype(o_ref.dtype)


# ---------------------------------------------------------------------------
# Wrapper
# ---------------------------------------------------------------------------
def bi_direct_adapter(x, folded_params, *, tm=1024, training=False, add_residual=False,
                      vmem_limit_bytes=None):
    """Fused adapter forward.  x: (B, N, C); folded_params from fold_adapter_params()."""
    if training:
        # TODO(synk): training-mode dropout (and un-folded mid layer) not implemented.
        raise NotImplementedError("bi_direct_adapter: eval-mode only (dropout = identity)")

    wd_eff, bd_eff, wu_p, bu_p = folded_params
    B, N, C = x.shape
    Hp = wd_eff.shape[1]
    M = B * N
    x2 = x.reshape(M, C)

    xb = jnp.dtype(x.dtype).itemsize
    wb = jnp.dtype(wd_eff.dtype).itemsize

    # ---- row tile: VMEM-derived cap, multiple of sublane packing (8 f32 / 16 bf16) ----
    sub = 16 if xb == 2 else 8
    weight_bytes = (C * Hp * 2 + Hp + C) * wb                  # resident weights (one buffer)
    vmem_cap = _vmem_capacity_bytes()
    budget = int(vmem_cap * 0.75)                              # headroom for compiler scratch
    avail = max(budget - 2 * weight_bytes - (2 << 20), sub * 4 * C * xb)
    per_row = 4 * C * xb                                       # double-buffered x-in + out tiles
    tm_cap = max(sub, (avail // per_row) // sub * sub)
    tm = min(tm, tm_cap)

    if tm >= M:
        # Keep the grid at >= 2 steps when possible: v7x shards the parallel axis
        # across its two TensorCores, and a 1-step grid also disables pipelining.
        if M >= 2 * sub:
            tm = _round_up(pl.cdiv(M, 2), sub)
        else:
            tm = M
    else:
        tm = max(sub, (tm // sub) * sub)
    grid = (pl.cdiv(M, tm),)

    # ---- VMEM limit derived from the actual working set ----
    working_set = 4 * tm * C * xb + 2 * weight_bytes + (2 << 20)
    if vmem_limit_bytes is None:
        vmem_limit_bytes = max(16 << 20, min(vmem_cap - (8 << 20), int(working_set * 1.25)))

    cost = pl.CostEstimate(
        flops=2 * M * (C * Hp + Hp * C),
        transcendentals=0,
        bytes_accessed=2 * M * C * xb + (C * Hp * 2 + Hp + C) * wb,
    )

    kernel = functools.partial(_adapter_kernel, add_residual=add_residual)

    def _call(single_buffer_weights):
        wkw = {"pipeline_mode": pl.Buffered(1)} if single_buffer_weights else {}
        in_specs = [
            pl.BlockSpec((tm, C), lambda i: (i, 0)),             # x rows tile
            pl.BlockSpec((C, Hp), lambda i: (0, 0), **wkw),      # folded down·mid weight (resident)
            pl.BlockSpec((1, Hp), lambda i: (0, 0), **wkw),      # folded down·mid bias
            pl.BlockSpec((Hp, C), lambda i: (0, 0), **wkw),      # up weight (resident)
            pl.BlockSpec((1, C), lambda i: (0, 0), **wkw),       # up bias
        ]
        return pl.pallas_call(
            kernel,
            out_shape=jax.ShapeDtypeStruct((M, C), x.dtype),
            grid_spec=pltpu.PrefetchScalarGridSpec(
                num_scalar_prefetch=0,
                grid=grid,
                in_specs=in_specs,
                out_specs=pl.BlockSpec((tm, C), lambda i: (i, 0)),
            ),
            compiler_params=pltpu.CompilerParams(
                dimension_semantics=("parallel",),
                vmem_limit_bytes=int(vmem_limit_bytes),
            ),
            cost_estimate=cost,
        )(x2, wd_eff, bd_eff, wu_p, bu_p)

    try:
        out = _call(True)       # single-buffer the grid-invariant weights (frees VMEM)
    except Exception:
        out = _call(False)      # fallback: default double-buffering

    return out.reshape(B, N, C)


# ---------------------------------------------------------------------------
# Parameter init (PyTorch zero-inits everything -> output would be identically 0;
# use small random values so the kernel computes something non-trivial).
# ---------------------------------------------------------------------------
def init_params(key, embed_dim, hidden_dim, dtype=jnp.float32):
    k1, k2, k3, k4, k5, k6 = jax.random.split(key, 6)
    scale = 0.02
    wd = (scale * jax.random.normal(k1, (embed_dim, hidden_dim))).astype(dtype)   # down.weight^T
    bd = (scale * jax.random.normal(k2, (1, hidden_dim))).astype(dtype)           # down.bias
    wm = (scale * jax.random.normal(k3, (hidden_dim, hidden_dim))).astype(dtype)  # mid.weight^T
    bm = (scale * jax.random.normal(k4, (1, hidden_dim))).astype(dtype)           # mid.bias
    wu = (scale * jax.random.normal(k5, (hidden_dim, embed_dim))).astype(dtype)   # up.weight^T
    bu = (scale * jax.random.normal(k6, (1, embed_dim))).astype(dtype)            # up.bias
    return wd, bd, wm, bm, wu, bu


def _reference(x, wd, bd, wm, bm, wu, bu):
    """Sequential 3-matmul reference in f32 (eval-mode dropout = identity)."""
    f32 = jnp.float32
    B, N, C = x.shape
    x2 = x.reshape(-1, C).astype(f32)
    h = x2 @ wd.astype(f32) + bd.astype(f32)
    h = h @ wm.astype(f32) + bm.astype(f32)
    y = h @ wu.astype(f32) + bu.astype(f32)
    return y.reshape(B, N, C)


if __name__ == "__main__":
    key = jax.random.PRNGKey(0)
    kx, kp, kx2 = jax.random.split(key, 3)

    # ---- Test 1: f32, lane-aligned C (batch=2, seq=16, embed_dim=256, hidden_dim=16) ----
    B, N, C, H = 2, 16, 256, 16
    x = jax.random.normal(kx, (B, N, C), jnp.float32)
    params = init_params(kp, C, H, jnp.float32)
    folded = fold_adapter_params(*params)

    y = jax.block_until_ready(bi_direct_adapter(x, folded))
    ref = _reference(x, *params)
    assert y.shape == (B, N, C)
    assert jnp.allclose(y, ref, atol=1e-4, rtol=1e-4), float(jnp.max(jnp.abs(y - ref)))

    # ---- Test 2: bf16 params/activations (fold precision -> relaxed tolerance) ----
    xb = x.astype(jnp.bfloat16)
    params_b = tuple(p.astype(jnp.bfloat16) for p in params)
    folded_b = fold_adapter_params(*params_b)
    yb = jax.block_until_ready(bi_direct_adapter(xb, folded_b))
    ref_b = _reference(xb, *params_b)
    assert yb.shape == (B, N, C)
    assert jnp.allclose(yb.astype(jnp.float32), ref_b, atol=2e-2), \
        float(jnp.max(jnp.abs(yb.astype(jnp.float32) - ref_b)))

    # ---- Test 3: non-128-aligned embed dim (full-extent last-dim blocks, no x pad/slice) ----
    C2, N2 = 192, 8
    x3 = jax.random.normal(kx2, (B, N2, C2), jnp.float32)
    params3 = init_params(jax.random.PRNGKey(7), C2, H, jnp.float32)
    folded3 = fold_adapter_params(*params3)
    y3 = jax.block_until_ready(bi_direct_adapter(x3, folded3))
    ref3 = _reference(x3, *params3)
    assert y3.shape == (B, N2, C2)
    assert jnp.allclose(y3, ref3, atol=1e-4, rtol=1e-4), float(jnp.max(jnp.abs(y3 - ref3)))

    print("KERNEL_OK")
</pallas_src>

<mosaic_0001>
module attributes {stable_mosaic.version = 11 : i64} {
  func.func @_adapter_kernel(%arg0: i32, %arg1: memref<16x256xf32, #tpu.memory_space<vmem>>, %arg2: memref<256x128xf32, #tpu.memory_space<vmem>>, %arg3: memref<1x128xf32, #tpu.memory_space<vmem>>, %arg4: memref<128x256xf32, #tpu.memory_space<vmem>>, %arg5: memref<1x256xf32, #tpu.memory_space<vmem>>, %arg6: memref<16x256xf32, #tpu.memory_space<vmem>>) attributes {dimension_semantics = [#tpu.dimension_semantics<parallel>], iteration_bounds = array<i64: 2>, scalar_prefetch = 0 : i64, scratch_operands = 0 : i64, tpu.core_type = #tpu.core_type<tc>, window_params = [{transform_indices = @transform_0, window_bounds = array<i64: 16, 256>}, {pipeline_mode = #tpu.pipeline_mode<synchronous>, transform_indices = @transform_1, window_bounds = array<i64: 256, 128>}, {pipeline_mode = #tpu.pipeline_mode<synchronous>, transform_indices = @transform_2, window_bounds = array<i64: 1, 128>}, {pipeline_mode = #tpu.pipeline_mode<synchronous>, transform_indices = @transform_3, window_bounds = array<i64: 128, 256>}, {pipeline_mode = #tpu.pipeline_mode<synchronous>, transform_indices = @transform_4, window_bounds = array<i64: 1, 256>}, {transform_indices = @transform_5, window_bounds = array<i64: 16, 256>}]} {
    %c0 = arith.constant 0 : index
    %c0_0 = arith.constant 0 : index
    %0 = vector.load %arg1[%c0, %c0_0] : memref<16x256xf32, #tpu.memory_space<vmem>>, vector<16x256xf32>
    %c0_1 = arith.constant 0 : index
    %c0_2 = arith.constant 0 : index
    %1 = vector.load %arg2[%c0_1, %c0_2] : memref<256x128xf32, #tpu.memory_space<vmem>>, vector<256x128xf32>
    %cst = arith.constant dense<0.000000e+00> : vector<16x128xf32>
    %2 = tpu.matmul %0, %1, %cst {dimension_numbers = #tpu.dot_dimension_numbers<[1], [0], [0], [1], [0, 0, 1, 1], [], []>} : vector<16x256xf32>, vector<256x128xf32>, vector<16x128xf32> -> vector<16x128xf32>
    %c0_3 = arith.constant 0 : index
    %c0_4 = arith.constant 0 : index
    %3 = vector.load %arg3[%c0_3, %c0_4] : memref<1x128xf32, #tpu.memory_space<vmem>>, vector<1x128xf32>
    %4 = vector.broadcast %3 : vector<1x128xf32> to vector<16x128xf32>
    %5 = arith.addf %2, %4 : vector<16x128xf32>
    %c0_5 = arith.constant 0 : index
    %c0_6 = arith.constant 0 : index
    %6 = vector.load %arg4[%c0_5, %c0_6] : memref<128x256xf32, #tpu.memory_space<vmem>>, vector<128x256xf32>
    %cst_7 = arith.constant dense<0.000000e+00> : vector<16x256xf32>
    %7 = tpu.matmul %5, %6, %cst_7 {dimension_numbers = #tpu.dot_dimension_numbers<[1], [0], [0], [1], [0, 0, 1, 1], [], []>} : vector<16x128xf32>, vector<128x256xf32>, vector<16x256xf32> -> vector<16x256xf32>
    %c0_8 = arith.constant 0 : index
    %c0_9 = arith.constant 0 : index
    %8 = vector.load %arg5[%c0_8, %c0_9] : memref<1x256xf32, #tpu.memory_space<vmem>>, vector<1x256xf32>
    %9 = vector.broadcast %8 : vector<1x256xf32> to vector<16x256xf32>
    %10 = arith.addf %7, %9 : vector<16x256xf32>
    %c0_10 = arith.constant 0 : index
    %c0_11 = arith.constant 0 : index
    %11 = vector.load %arg6[%c0_10, %c0_11] : memref<16x256xf32, #tpu.memory_space<vmem>>, vector<16x256xf32>
    tpu.vector_store %arg6[%c0_10, %c0_11], %10 {strides = array<i32>} : memref<16x256xf32, #tpu.memory_space<vmem>>, vector<16x256xf32>,
    return
  }
  func.func @transform_0(%arg0: i32) -> (i32, i32) {
    %c0_i32 = arith.constant 0 : i32
    %c0_i32_0 = arith.constant 0 : i32
    return %arg0, %c0_i32 : i32, i32
  }
  func.func @transform_1(%arg0: i32) -> (i32, i32) {
    %c0_i32 = arith.constant 0 : i32
    %c0_i32_0 = arith.constant 0 : i32
    %c0_i32_1 = arith.constant 0 : i32
    return %c0_i32, %c0_i32_0 : i32, i32
  }
  func.func @transform_2(%arg0: i32) -> (i32, i32) {
    %c0_i32 = arith.constant 0 : i32
    %c0_i32_0 = arith.constant 0 : i32
    %c0_i32_1 = arith.constant 0 : i32
    return %c0_i32, %c0_i32_0 : i32, i32
  }
  func.func @transform_3(%arg0: i32) -> (i32, i32) {
    %c0_i32 = arith.constant 0 : i32
    %c0_i32_0 = arith.constant 0 : i32
    %c0_i32_1 = arith.constant 0 : i32
    return %c0_i32, %c0_i32_0 : i32, i32
  }
  func.func @transform_4(%arg0: i32) -> (i32, i32) {
    %c0_i32 = arith.constant 0 : i32
    %c0_i32_0 = arith.constant 0 : i32
    %c0_i32_1 = arith.constant 0 : i32
    return %c0_i32, %c0_i32_0 : i32, i32
  }
  func.func @transform_5(%arg0: i32) -> (i32, i32) {
    %c0_i32 = arith.constant 0 : i32
    %c0_i32_0 = arith.constant 0 : i32
    return %arg0, %c0_i32 : i32, i32
  }
}

module attributes {stable_mosaic.version = 11 : i64} {
  func.func @_adapter_kernel(%arg0: i32, %arg1: memref<16x256xf32, #tpu.memory_space<vmem>>, %arg2: memref<256x128xf32, #tpu.memory_space<vmem>>, %arg3: memref<1x128xf32, #tpu.memory_space<vmem>>, %arg4: memref<128x256xf32, #tpu.memory_space<vmem>>, %arg5: memref<1x256xf32, #tpu.memory_space<vmem>>, %arg6: memref<16x256xf32, #tpu.memory_space<vmem>>) attributes {dimension_semantics = [#tpu.dimension_semantics<parallel>], iteration_bounds = array<i64: 2>, scalar_prefetch = 0 : i64, scratch_operands = 0 : i64, tpu.core_type = #tpu.core_type<tc>, window_params = [{transform_indices = @transform_0, window_bounds = array<i64: 16, 256>}, {pipeline_mode = #tpu.pipeline_mode<synchronous>, transform_indices = @transform_1, window_bounds = array<i64: 256, 128>}, {pipeline_mode = #tpu.pipeline_mode<synchronous>, transform_indices = @transform_2, window_bounds = array<i64: 1, 128>}, {pipeline_mode = #tpu.pipeline_mode<synchronous>, transform_indices = @transform_3, window_bounds = array<i64: 128, 256>}, {pipeline_mode = #tpu.pipeline_mode<synchronous>, transform_indices = @transform_4, window_bounds = array<i64: 1, 256>}, {transform_indices = @transform_5, window_bounds = array<i64: 16, 256>}]} {
    %c0 = arith.constant 0 : index
    %c0_0 = arith.constant 0 : index
    %0 = vector.load %arg1[%c0, %c0_0] : memref<16x256xf32, #tpu.memory_space<vmem>>, vector<16x256xf32>
    %c0_1 = arith.constant 0 : index
    %c0_2 = arith.constant 0 : index
    %1 = vector.load %arg2[%c0_1, %c0_2] : memref<256x128xf32, #tpu.memory_space<vmem>>, vector<256x128xf32>
    %cst = arith.constant dense<0.000000e+00> : vector<16x128xf32>
    %2 = tpu.matmul %0, %1, %cst {dimension_numbers = #tpu.dot_dimension_numbers<[1], [0], [0], [1], [0, 0, 1, 1], [], []>} : vector<16x256xf32>, vector<256x128xf32>, vector<16x128xf32> -> vector<16x128xf32>
    %c0_3 = arith.constant 0 : index
    %c0_4 = arith.constant 0 : index
    %3 = vector.load %arg3[%c0_3, %c0_4] : memref<1x128xf32, #tpu.memory_space<vmem>>, vector<1x128xf32>
    %4 = vector.broadcast %3 : vector<1x128xf32> to vector<16x128xf32>
    %5 = arith.addf %2, %4 : vector<16x128xf32>
    %c0_5 = arith.constant 0 : index
    %c0_6 = arith.constant 0 : index
    %6 = vector.load %arg4[%c0_5, %c0_6] : memref<128x256xf32, #tpu.memory_space<vmem>>, vector<128x256xf32>
    %cst_7 = arith.constant dense<0.000000e+00> : vector<16x256xf32>
    %7 = tpu.matmul %5, %6, %cst_7 {dimension_numbers = #tpu.dot_dimension_numbers<[1], [0], [0], [1], [0, 0, 1, 1], [], []>} : vector<16x128xf32>, vector<128x256xf32>, vector<16x256xf32> -> vector<16x256xf32>
    %c0_8 = arith.constant 0 : index
    %c0_9 = arith.constant 0 : index
    %8 = vector.load %arg5[%c0_8, %c0_9] : memref<1x256xf32, #tpu.memory_space<vmem>>, vector<1x256xf32>
    %9 = vector.broadcast %8 : vector<1x256xf32> to vector<16x256xf32>
    %10 = arith.addf %7, %9 : vector<16x256xf32>
    %c0_10 = arith.constant 0 : index
    %c0_11 = arith.constant 0 : index
    %11 = vector.load %arg6[%c0_10, %c0_11] : memref<16x256xf32, #tpu.memory_space<vmem>>, vector<16x256xf32>
    tpu.vector_store %arg6[%c0_10, %c0_11], %10 {strides = array<i32>} : memref<16x256xf32, #tpu.memory_space<vmem>>, vector<16x256xf32>,
    return
  }
  func.func @transform_0(%arg0: i32) -> (i32, i32) {
    %c0_i32 = arith.constant 0 : i32
    %c0_i32_0 = arith.constant 0 : i32
    return %arg0, %c0_i32 : i32, i32
  }
  func.func @transform_1(%arg0: i32) -> (i32, i32) {
    %c0_i32 = arith.constant 0 : i32
    %c0_i32_0 = arith.constant 0 : i32
    %c0_i32_1 = arith.constant 0 : i32
    return %c0_i32, %c0_i32_0 : i32, i32
  }
  func.func @transform_2(%arg0: i32) -> (i32, i32) {
    %c0_i32 = arith.constant 0 : i32
    %c0_i32_0 = arith.constant 0 : i32
    %c0_i32_1 = arith.constant 0 : i32
    return %c0_i32, %c0_i32_0 : i32, i32
  }
  func.func @transform_3(%arg0: i32) -> (i32, i32) {
    %c0_i32 = arith.constant 0 : i32
    %c0_i32_0 = arith.constant 0 : i32
    %c0_i32_1 = arith.constant 0 : i32
    return %c0_i32, %c0_i32_0 : i32, i32
  }
  func.func @transform_4(%arg0: i32) -> (i32, i32) {
    %c0_i32 = arith.constant 0 : i32
    %c0_i32_0 = arith.constant 0 : i32
    %c0_i32_1 = arith.constant 0 : i32
    return %c0_i32, %c0_i32_0 : i32, i32
  }
  func.func @transform_5(%arg0: i32) -> (i32, i32) {
    %c0_i32 = arith.constant 0 : i32
    %c0_i32_0 = arith.constant 0 : i32
    return %arg0, %c0_i32 : i32, i32
  }
}

</mosaic_0001>

<llo_original>
// kernel: tpu_custom_call.1
$region0: #{tpu_custom_call.1}
  #allocation0 [shape = 'u32[]', space=smem, size = 0x4, offset = 0x4, fixed_abs, tag = 'smem constant byte address 0x4 - core index']
  #allocation1 [shape = 'u32[72,128]{1,0:T(1,128)}', space=vmem, size = 0x9000, scoped, tag = 'internal scratch']
  %s0 = inlined_call_operand.hbm [shape: f32[32,256], index: 0, kind: input, shape index: {}]
  %s1 = inlined_call_operand.hbm [shape: f32[256,128], index: 1, kind: input, shape index: {}]
  %s2 = inlined_call_operand.vmem [shape: f32[1,128], index: 2, kind: input, shape index: {}]
  %s3 = inlined_call_operand.hbm [shape: f32[128,256], index: 3, kind: input, shape index: {}]
  %s4 = inlined_call_operand.vmem [shape: f32[1,256], index: 4, kind: input, shape index: {}]
  %s5 = inlined_call_operand.hbm [shape: f32[32,256], index: 5, kind: output, shape index: {}]
  %s6 = sld [smem:[#allocation0]]
  $region65: #{tpu_custom_call.1} parent=0
    _
  %s8 = ssub.s32 1, %s6
  %s9 = scalar_select 0, %s8, %s6
  $region1: #{tpu_custom_call.1} parent=0
    #allocation2 [shape = 'u8[32768]{0}', space=vmem, size = 0x8000, scoped, tag = 'input window, operand 0']
    #allocation3 [shape = 's32[2]{0}', space=sflag, size = 0x8, scoped, tag = 'scoped memory for tpu_custom_call.1']
    #allocation4 [shape = 's32[2]{0}', space=sflag, size = 0x8, scoped, tag = 'scoped memory for tpu_custom_call.1']
    #allocation5 [shape = 'u8[131072]{0}', space=vmem, size = 0x20000, scoped, tag = 'input window, operand 1, single buffered']
    #allocation6 [shape = 's32[1]{0}', space=sflag, size = 0x4, scoped, tag = 'scoped memory for tpu_custom_call.1']
    #allocation7 [shape = 'u8[131072]{0}', space=vmem, size = 0x20000, scoped, tag = 'input window, operand 3, single buffered']
    #allocation8 [shape = 'u8[32768]{0}', space=vmem, size = 0x8000, scoped, tag = 'output window, operand 0']
    %10 = vsyncpa [#allocation3], 0
    %s11 = scalar_lea.sflag [#allocation3], 1
    %12 = vsyncpa %s11, 0
    %13 = vsyncpa [#allocation6], 0
    %14 = vsyncpa [#allocation4], 0
    %s15 = scalar_lea.sflag [#allocation4], 1
    %16 = vsyncpa %s15, 0
    loop: start=0, step=1, limit=4
    $region2: #{tpu_custom_call.1} parent=1 // loop_pre_header
      _
    $region3: #{tpu_custom_call.1} parent=1 // loop_header
      %s18 = sphi 0, %s22
      %p19 = scmp.ge.s32.totalorder %s18, 4
      %s28 = sphi 0, %s30
      %s31 = sphi 0, %s28
      %s32 = sphi 0, %s31
      %s48 = sphi 0, %s32
      %s52 = sphi 0, %s52
      %s54 = sphi 0, %s52
      %s55 = sphi 0, %s54
      %s69 = sphi 0, %s55
      %s73 = sphi 0, %s73
      %s75 = sphi 0, %s73
      %s76 = sphi 0, %s75
      %s90 = sphi 0, %s76
      %s94 = sphi 0, %s94
      %s96 = sphi 0, %s94
      %s97 = sphi 0, %s96
      %s111 = sphi 0, %s97
      %s115 = sphi 0, %s115
      %s117 = sphi 0, %s115
      %s118 = sphi 0, %s117
      %s132 = sphi 0, %s118
      %s138 = sphi 0, %s140
      %s141 = sphi 0, %s138
      %s142 = sphi 0, %s141
      %s158 = sphi 0, %s142
    $region4: #{tpu_custom_call.1} parent=1 // loop_header_branch
      %21 = sbr.rel (%p19) target = $region8
    $region5: #{tpu_custom_call.1} parent=1 // loop_body
      %s23 = ssub.s32 %s18, 1
      %s24 = ssub.s32 %s18, 2
      %s25 = sadd.s32 %s18, 1
      %s26 = ssub.s32 %s18, %s25
      %p27 = scmp.eq.s32.totalorder %s26, 0
      %s29 = sadd.s32 %s28, 1
      %s30 = scalar_select %p27, %s28, %s29
      %p33 = pneg %p27
      %p34 = scmp.eq.s32.totalorder %s18, 1
      %p35 = por %p33, %p34
      %p36 = scmp.ne.s32.totalorder %s28, %s31
      %p37 = scmp.eq.s32.totalorder %s18, 0
      %p38 = por %p36, %p37
      %p39 = scmp.ne.s32.totalorder %s28, %s31
      %p40 = scmp.eq.s32.totalorder %s23, 1
      %p41 = por %p39, %p40
      %p42 = scmp.ne.s32.totalorder %s31, %s32
      %p43 = scmp.eq.s32.totalorder %s23, 0
      %p44 = por %p42, %p43
      %p45 = scmp.ne.s32.totalorder %s31, %s32
      %p46 = scmp.eq.s32.totalorder %s24, 1
      %p47 = por %p45, %p46
      %p49 = scmp.ne.s32.totalorder %s32, %s48
      %p50 = scmp.eq.s32.totalorder %s24, 0
      %p51 = por %p49, %p50
      %s53 = sadd.s32 %s52, 1
      %p56 = scmp.eq.s32.totalorder %s18, 1
      %p57 = scmp.ne.s32.totalorder %s52, %s54
      %p58 = scmp.eq.s32.totalorder %s18, 0
      %p59 = por %p57, %p58
      %p60 = scmp.ne.s32.totalorder %s52, %s54
      %p61 = scmp.eq.s32.totalorder %s23, 1
      %p62 = por %p60, %p61
      %p63 = scmp.ne.s32.totalorder %s54, %s55
      %p64 = scmp.eq.s32.totalorder %s23, 0
      %p65 = por %p63, %p64
      %p66 = scmp.ne.s32.totalorder %s54, %s55
      %p67 = scmp.eq.s32.totalorder %s24, 1
      %p68 = por %p66, %p67
      %p70 = scmp.ne.s32.totalorder %s55, %s69
      %p71 = scmp.eq.s32.totalorder %s24, 0
      %p72 = por %p70, %p71
      %s74 = sadd.s32 %s73, 1
      %p77 = scmp.eq.s32.totalorder %s18, 1
      %p78 = scmp.ne.s32.totalorder %s73, %s75
      %p79 = scmp.eq.s32.totalorder %s18, 0
      %p80 = por %p78, %p79
      %p81 = scmp.ne.s32.totalorder %s73, %s75
      %p82 = scmp.eq.s32.totalorder %s23, 1
      %p83 = por %p81, %p82
      %p84 = scmp.ne.s32.totalorder %s75, %s76
      %p85 = scmp.eq.s32.totalorder %s23, 0
      %p86 = por %p84, %p85
      %p87 = scmp.ne.s32.totalorder %s75, %s76
      %p88 = scmp.eq.s32.totalorder %s24, 1
      %p89 = por %p87, %p88
      %p91 = scmp.ne.s32.totalorder %s76, %s90
      %p92 = scmp.eq.s32.totalorder %s24, 0
      %p93 = por %p91, %p92
      %s95 = sadd.s32 %s94, 1
      %p98 = scmp.eq.s32.totalorder %s18, 1
      %p99 = scmp.ne.s32.totalorder %s94, %s96
      %p100 = scmp.eq.s32.totalorder %s18, 0
      %p101 = por %p99, %p100
      %p102 = scmp.ne.s32.totalorder %s94, %s96
      %p103 = scmp.eq.s32.totalorder %s23, 1
      %p104 = por %p102, %p103
      %p105 = scmp.ne.s32.totalorder %s96, %s97
      %p106 = scmp.eq.s32.totalorder %s23, 0
      %p107 = por %p105, %p106
      %p108 = scmp.ne.s32.totalorder %s96, %s97
      %p109 = scmp.eq.s32.totalorder %s24, 1
      %p110 = por %p108, %p109
      %p112 = scmp.ne.s32.totalorder %s97, %s111
      %p113 = scmp.eq.s32.totalorder %s24, 0
      %p114 = por %p112, %p113
      %s116 = sadd.s32 %s115, 1
      %p119 = scmp.eq.s32.totalorder %s18, 1
      %p120 = scmp.ne.s32.totalorder %s115, %s117
      %p121 = scmp.eq.s32.totalorder %s18, 0
      %p122 = por %p120, %p121
      %p123 = scmp.ne.s32.totalorder %s115, %s117
      %p124 = scmp.eq.s32.totalorder %s23, 1
      %p125 = por %p123, %p124
      %p126 = scmp.ne.s32.totalorder %s117, %s118
      %p127 = scmp.eq.s32.totalorder %s23, 0
      %p128 = por %p126, %p127
      %p129 = scmp.ne.s32.totalorder %s117, %s118
      %p130 = scmp.eq.s32.totalorder %s24, 1
      %p131 = por %p129, %p130
      %p133 = scmp.ne.s32.totalorder %s118, %s132
      %p134 = scmp.eq.s32.totalorder %s24, 0
      %p135 = por %p133, %p134
      %s136 = ssub.s32 %s18, %s25
      %p137 = scmp.eq.s32.totalorder %s136, 0
      %s139 = sadd.s32 %s138, 1
      %s140 = scalar_select %p137, %s138, %s139
      %p143 = pneg %p137
      %p144 = scmp.eq.s32.totalorder %s18, 1
      %p145 = por %p143, %p144
      %p146 = scmp.ne.s32.totalorder %s138, %s141
      %p147 = scmp.eq.s32.totalorder %s18, 0
      %p148 = por %p146, %p147
      %p149 = scmp.ne.s32.totalorder %s138, %s141
      %p150 = scmp.eq.s32.totalorder %s23, 1
      %p151 = por %p149, %p150
      %p152 = scmp.ne.s32.totalorder %s141, %s142
      %p153 = scmp.eq.s32.totalorder %s23, 0
      %p154 = por %p152, %p153
      %p155 = scmp.ne.s32.totalorder %s141, %s142
      %p156 = scmp.eq.s32.totalorder %s24, 1
      %p157 = por %p155, %p156
      %p159 = scmp.ne.s32.totalorder %s142, %s158
      %p160 = scmp.eq.s32.totalorder %s24, 0
      %p161 = por %p159, %p160
      %p162 = scmp.le.s32.totalorder 1, %s18
      %p163 = scmp.lt.s32.totalorder %s18, 3
      %p164 = pnand %p162, %p163
      %p165 = pneg %p164
      // Predicated region
      $region9: #{tpu_custom_call.1} parent=5 // pred_check
        _
      $region10: #{tpu_custom_call.1} parent=5 // pred_check_branch
        %167 = sbr.rel (%p164) target = $region12
      $region11: #{tpu_custom_call.1} parent=5 // pred_region
        %s168 = ssub.s32 %s18, 1
        // Predicated region
        $region13: #{tpu_custom_call.1} parent=11 // pred_check
          %p169 = pneg %p65
        $region14: #{tpu_custom_call.1} parent=11 // pred_check_branch
          %171 = sbr.rel (%p169) target = $region16
        $region15: #{tpu_custom_call.1} parent=11 // pred_region
          %173 = vsyncadd [#allocation6], 0
          %s174 = sshll.u32 %s1, 4
          %s175 = int_to_ptr.hbm [resolvable:$true] %s174
          %s176 = sshll.u32 [#allocation5], 4
          %s177 = int_to_ptr.vmem [resolvable:$true] %s176
          %182 = dma.hbm_to_vmem [thread:$0]  %s175, 4096, %s177, [#allocation6], 128, 128, 8
        $region16: #{tpu_custom_call.1} parent=11 // pred_fallthru
          _
        // Predicated region
        $region17: #{tpu_custom_call.1} parent=11 // pred_check
          %p183 = pneg %p86
        $region18: #{tpu_custom_call.1} parent=11 // pred_check_branch
          %185 = sbr.rel (%p183) target = $region20
        $region19: #{tpu_custom_call.1} parent=11 // pred_region
          _
        $region20: #{tpu_custom_call.1} parent=11 // pred_fallthru
          _
        // Predicated region
        $region21: #{tpu_custom_call.1} parent=11 // pred_check
          %p186 = pneg %p107
        $region22: #{tpu_custom_call.1} parent=11 // pred_check_branch
          %188 = sbr.rel (%p186) target = $region24
        $region23: #{tpu_custom_call.1} parent=11 // pred_region
          %190 = vsyncadd [#allocation6], 0
          %s191 = sshll.u32 %s3, 4
          %s192 = int_to_ptr.hbm [resolvable:$true] %s191
          %s193 = sshll.u32 [#allocation7], 4
          %s194 = int_to_ptr.vmem [resolvable:$true] %s193
          %199 = dma.hbm_to_vmem [thread:$0]  %s192, 4096, %s194, [#allocation6], 256, 256, 16
        $region24: #{tpu_custom_call.1} parent=11 // pred_fallthru
          _
        // Predicated region
        $region25: #{tpu_custom_call.1} parent=11 // pred_check
          %p200 = pneg %p128
        $region26: #{tpu_custom_call.1} parent=11 // pred_check_branch
          %202 = sbr.rel (%p200) target = $region28
        $region27: #{tpu_custom_call.1} parent=11 // pred_region
          _
        $region28: #{tpu_custom_call.1} parent=11 // pred_fallthru
          _
      $region12: #{tpu_custom_call.1} parent=5 // pred_fallthru
        _
      %p203 = scmp.lt.s32.totalorder %s18, 2
      // Predicated region
      $region29: #{tpu_custom_call.1} parent=5 // pred_check
        %p204 = pneg %p203
      $region30: #{tpu_custom_call.1} parent=5 // pred_check_branch
        %206 = sbr.rel (%p204) target = $region32
      $region31: #{tpu_custom_call.1} parent=5 // pred_region
        // Predicated region
        $region33: #{tpu_custom_call.1} parent=31 // pred_check
          %p207 = pneg %p38
        $region34: #{tpu_custom_call.1} parent=31 // pred_check_branch
          %209 = sbr.rel (%p207) target = $region36
        $region35: #{tpu_custom_call.1} parent=31 // pred_region
          %s210 = sand.u32 %s28, 1
          %s211 = scalar_lea.sflag [#allocation3], %s210
          %s212 = sand.u32 %s28, 1
          %s213 = smul.addr %s212, 32
          %s214 = scalar_lea.vmem [#allocation2], %s213
          %s215 = smul.u32 2, %s18
          %217 = vsyncadd %s211, 0
          %s218 = smul.addr %s215, 2
          %s219 = smul.addr %s218, 8
          %s220 = scalar_lea.hbm %s0, %s219
          %s221 = sshll.u32 %s220, 4
          %s222 = int_to_ptr.hbm [resolvable:$true] %s221
          %s223 = sshll.u32 %s214, 4
          %s224 = int_to_ptr.vmem [resolvable:$true] %s223
          %229 = dma.hbm_to_vmem [thread:$0]  %s222, 512, %s224, %s211, 256, 256, 16
        $region36: #{tpu_custom_call.1} parent=31 // pred_fallthru
          _
      $region32: #{tpu_custom_call.1} parent=5 // pred_fallthru
        _
      %p230 = scmp.le.s32.totalorder 1, %s18
      %p231 = scmp.lt.s32.totalorder %s18, 3
      %p232 = pnand %p230, %p231
      %p233 = pneg %p232
      // Predicated region
      $region37: #{tpu_custom_call.1} parent=5 // pred_check
        _
      $region38: #{tpu_custom_call.1} parent=5 // pred_check_branch
        %235 = sbr.rel (%p232) target = $region40
      $region39: #{tpu_custom_call.1} parent=5 // pred_region
        %s236 = ssub.s32 %s18, 1
        %s237 = sand.u32 %s31, 1
        %s238 = scalar_lea.sflag [#allocation3], %s237
        %s239 = sand.u32 %s31, 1
        %s240 = smul.addr %s239, 32
        %s241 = scalar_lea.vmem [#allocation2], %s240
        // Predicated region
        $region41: #{tpu_custom_call.1} parent=39 // pred_check
          %p242 = pneg %p44
        $region42: #{tpu_custom_call.1} parent=39 // pred_check_branch
          %244 = sbr.rel (%p242) target = $region44
        $region43: #{tpu_custom_call.1} parent=39 // pred_region
          %246 = dma.done %s238, 512
        $region44: #{tpu_custom_call.1} parent=39 // pred_fallthru
          _
        // Predicated region
        $region45: #{tpu_custom_call.1} parent=39 // pred_check
          %p247 = pneg %p65
        $region46: #{tpu_custom_call.1} parent=39 // pred_check_branch
          %249 = sbr.rel (%p247) target = $region48
        $region47: #{tpu_custom_call.1} parent=39 // pred_region
          %251 = dma.done [#allocation6], 4096
        $region48: #{tpu_custom_call.1} parent=39 // pred_fallthru
          _
        // Predicated region
        $region49: #{tpu_custom_call.1} parent=39 // pred_check
          %p252 = pneg %p107
        $region50: #{tpu_custom_call.1} parent=39 // pred_check_branch
          %254 = sbr.rel (%p252) target = $region52
        $region51: #{tpu_custom_call.1} parent=39 // pred_region
          %256 = dma.done [#allocation6], 4096
        $region52: #{tpu_custom_call.1} parent=39 // pred_fallthru
          _
        %s257 = sand.u32 %s31, 1
        %s258 = scalar_lea.sflag [#allocation3], %s257
        %s259 = sand.u32 %s31, 1
        %s260 = smul.addr %s259, 32
        %s261 = scalar_lea.vmem [#allocation2], %s260
        %p262 = pneg %p44
        %p263 = pneg %p41
        %p264 = pneg %p65
        %p265 = pneg %p62
        %p266 = pneg %p86
        %p267 = pneg %p83
        %p268 = pneg %p107
        %p269 = pneg %p104
        %p270 = pneg %p128
        %p271 = pneg %p125
        %p272 = pneg %p154
        %p273 = pneg %p151
        %s274 = sand.u32 %s141, 1
        %s275 = scalar_lea.sflag [#allocation4], %s274
        %s276 = sand.u32 %s141, 1
        %s277 = smul.addr %s276, 32
        %s278 = scalar_lea.vmem [#allocation8], %s277
        %s279 = smul.u32 2, %s23
        %s280 = smul.u32 2, %s23
        %v281 = vld [vmem:[%s241] sm:$0xff]
        %v282 = vld [vmem:[%s241 + $0x8] sm:$0xff]
        %v283 = vld [vmem:[%s241 + $0x10] sm:$0xff]
        %v284 = vld [vmem:[%s241 + $0x18] sm:$0xff]
        %v285 = vld [vmem:[#allocation5] sm:$0xff]
        %v286 = vld [vmem:[#allocation5 + $0x8] sm:$0xff]
        %v287 = vld [vmem:[#allocation5 + $0x10] sm:$0xff]
        %v288 = vld [vmem:[#allocation5 + $0x18] sm:$0xff]
        %v289 = vld [vmem:[#allocation5 + $0x20] sm:$0xff]
        %v290 = vld [vmem:[#allocation5 + $0x28] sm:$0xff]
        %v291 = vld [vmem:[#allocation5 + $0x30] sm:$0xff]
        %v292 = vld [vmem:[#allocation5 + $0x38] sm:$0xff]
        %v293 = vld [vmem:[#allocation5 + $0x40] sm:$0xff]
        %v294 = vld [vmem:[#allocation5 + $0x48] sm:$0xff]
        %v295 = vld [vmem:[#allocation5 + $0x50] sm:$0xff]
        %v296 = vld [vmem:[#allocation5 + $0x58] sm:$0xff]
        %v297 = vld [vmem:[#allocation5 + $0x60] sm:$0xff]
        %v298 = vld [vmem:[#allocation5 + $0x68] sm:$0xff]
        %v299 = vld [vmem:[#allocation5 + $0x70] sm:$0xff]
        %v300 = vld [vmem:[#allocation5 + $0x78] sm:$0xff]
        %v301 = vld [vmem:[#allocation5 + $0x80] sm:$0xff]
        %v302 = vld [vmem:[#allocation5 + $0x88] sm:$0xff]
        %v303 = vld [vmem:[#allocation5 + $0x90] sm:$0xff]
        %v304 = vld [vmem:[#allocation5 + $0x98] sm:$0xff]
        %v305 = vld [vmem:[#allocation5 + $0xa0] sm:$0xff]
        %v306 = vld [vmem:[#allocation5 + $0xa8] sm:$0xff]
        %v307 = vld [vmem:[#allocation5 + $0xb0] sm:$0xff]
        %v308 = vld [vmem:[#allocation5 + $0xb8] sm:$0xff]
        %v309 = vld [vmem:[#allocation5 + $0xc0] sm:$0xff]
        %v310 = vld [vmem:[#allocation5 + $0xc8] sm:$0xff]
        %v311 = vld [vmem:[#allocation5 + $0xd0] sm:$0xff]
        %v312 = vld [vmem:[#allocation5 + $0xd8] sm:$0xff]
        %v313 = vld [vmem:[#allocation5 + $0xe0] sm:$0xff]
        %v314 = vld [vmem:[#allocation5 + $0xe8] sm:$0xff]
        %v315 = vld [vmem:[#allocation5 + $0xf0] sm:$0xff]
        %v316 = vld [vmem:[#allocation5 + $0xf8] sm:$0xff]
        %v317 = vld [vmem:[%s2] sm:$0x1]
        %v319 = vperm.slane %v317, 0
        %321 = vmatpush.msra.mxu0 %v300
        %322 = vmatpush.msra.mxu0 %v299
        %323 = vmatpush.msra.mxu0 %v298
        %324 = vmatpush.msra.mxu0 %v297
        %325 = vmatpush.msra.mxu0 %v296
        %326 = vmatpush.msra.mxu0 %v295
        %327 = vmatpush.msra.mxu0 %v294
        %328 = vmatpush.msra.mxu0 %v293
        %329 = vmatpush.msra.mxu0 %v292
        %330 = vmatpush.msra.mxu0 %v291
        %331 = vmatpush.msra.mxu0 %v290
        %332 = vmatpush.msra.mxu0 %v289
        %333 = vmatpush.msra.mxu0 %v288
        %334 = vmatpush.msra.mxu0 %v287
        %335 = vmatpush.msra.mxu0 %v286
        %336 = vmatpush.msra.mxu0 %v285
        %337 = vmatmul.f32.gmra.mxu0 %v281
        %v338 = vpop.f32.mrf.mxu0
        %v339 = vadd.f32 %v319, %v338
        %340 = vmatmul.f32.gmra.mxu0 %v283
        %v341 = vpop.f32.mrf.mxu0
        %v342 = vadd.f32 %v319, %v341
        %343 = vdwg.mxu0
        %344 = vmatpush.msra.mxu0 %v316
        %345 = vmatpush.msra.mxu0 %v315
        %346 = vmatpush.msra.mxu0 %v314
        %347 = vmatpush.msra.mxu0 %v313
        %348 = vmatpush.msra.mxu0 %v312
        %349 = vmatpush.msra.mxu0 %v311
        %350 = vmatpush.msra.mxu0 %v310
        %351 = vmatpush.msra.mxu0 %v309
        %352 = vmatpush.msra.mxu0 %v308
        %353 = vmatpush.msra.mxu0 %v307
        %354 = vmatpush.msra.mxu0 %v306
        %355 = vmatpush.msra.mxu0 %v305
        %356 = vmatpush.msra.mxu0 %v304
        %357 = vmatpush.msra.mxu0 %v303
        %358 = vmatpush.msra.mxu0 %v302
        %359 = vmatpush.msra.mxu0 %v301
        %360 = vmatmul.f32.gmra.mxu0 %v282
        %v361 = vpop.f32.mrf.mxu0
        %v362 = vadd.f32 %v339, %v361
        %363 = vmatmul.f32.gmra.mxu0 %v284
        %v364 = vpop.f32.mrf.mxu0
        %v365 = vadd.f32 %v342, %v364
        %366 = vdwg.mxu0
        %v367 = vld [vmem:[#allocation7] sm:$0xff]
        %v368 = vld [vmem:[#allocation7 + $0x8] sm:$0xff]
        %v369 = vld [vmem:[#allocation7 + $0x10] sm:$0xff]
        %v370 = vld [vmem:[#allocation7 + $0x18] sm:$0xff]
        %v371 = vld [vmem:[#allocation7 + $0x20] sm:$0xff]
        %v372 = vld [vmem:[#allocation7 + $0x28] sm:$0xff]
        %v373 = vld [vmem:[#allocation7 + $0x30] sm:$0xff]
        %v374 = vld [vmem:[#allocation7 + $0x38] sm:$0xff]
        %v375 = vld [vmem:[#allocation7 + $0x40] sm:$0xff]
        %v376 = vld [vmem:[#allocation7 + $0x48] sm:$0xff]
        %v377 = vld [vmem:[#allocation7 + $0x50] sm:$0xff]
        %v378 = vld [vmem:[#allocation7 + $0x58] sm:$0xff]
        %v379 = vld [vmem:[#allocation7 + $0x60] sm:$0xff]
        %v380 = vld [vmem:[#allocation7 + $0x68] sm:$0xff]
        %v381 = vld [vmem:[#allocation7 + $0x70] sm:$0xff]
        %v382 = vld [vmem:[#allocation7 + $0x78] sm:$0xff]
        %v383 = vld [vmem:[#allocation7 + $0x80] sm:$0xff]
        %v384 = vld [vmem:[#allocation7 + $0x88] sm:$0xff]
        %v385 = vld [vmem:[#allocation7 + $0x90] sm:$0xff]
        %v386 = vld [vmem:[#allocation7 + $0x98] sm:$0xff]
        %v387 = vld [vmem:[#allocation7 + $0xa0] sm:$0xff]
        %v388 = vld [vmem:[#allocation7 + $0xa8] sm:$0xff]
        %v389 = vld [vmem:[#allocation7 + $0xb0] sm:$0xff]
        %v390 = vld [vmem:[#allocation7 + $0xb8] sm:$0xff]
        %v391 = vld [vmem:[#allocation7 + $0xc0] sm:$0xff]
        %v392 = vld [vmem:[#allocation7 + $0xc8] sm:$0xff]
        %v393 = vld [vmem:[#allocation7 + $0xd0] sm:$0xff]
        %v394 = vld [vmem:[#allocation7 + $0xd8] sm:$0xff]
        %v395 = vld [vmem:[#allocation7 + $0xe0] sm:$0xff]
        %v396 = vld [vmem:[#allocation7 + $0xe8] sm:$0xff]
        %v397 = vld [vmem:[#allocation7 + $0xf0] sm:$0xff]
        %v398 = vld [vmem:[#allocation7 + $0xf8] sm:$0xff]
        %v399 = vld [vmem:[%s4] sm:$0x3]
        %v401 = vperm.slane %v399, 0
        %v402 = vperm.slane %v399, 1
        %405 = vmatpush.msra.mxu0 %v397
        %406 = vmatpush.msra.mxu0 %v395
        %407 = vmatpush.msra.mxu0 %v393
        %408 = vmatpush.msra.mxu0 %v391
        %409 = vmatpush.msra.mxu0 %v389
        %410 = vmatpush.msra.mxu0 %v387
        %411 = vmatpush.msra.mxu0 %v385
        %412 = vmatpush.msra.mxu0 %v383
        %413 = vmatpush.msra.mxu0 %v381
        %414 = vmatpush.msra.mxu0 %v379
        %415 = vmatpush.msra.mxu0 %v377
        %416 = vmatpush.msra.mxu0 %v375
        %417 = vmatpush.msra.mxu0 %v373
        %418 = vmatpush.msra.mxu0 %v371
        %419 = vmatpush.msra.mxu0 %v369
        %420 = vmatpush.msra.mxu0 %v367
        %421 = vmatmul.f32.gmra.mxu0 %v362
        %v422 = vpop.f32.mrf.mxu0
        %v423 = vadd.f32 %v401, %v422
        %424 = vmatmul.f32.gmra.mxu0 %v365
        %v425 = vpop.f32.mrf.mxu0
        %v426 = vadd.f32 %v401, %v425
        %427 = vdwg.mxu0
        %428 = vmatpush.msra.mxu0 %v398
        %429 = vmatpush.msra.mxu0 %v396
        %430 = vmatpush.msra.mxu0 %v394
        %431 = vmatpush.msra.mxu0 %v392
        %432 = vmatpush.msra.mxu0 %v390
        %433 = vmatpush.msra.mxu0 %v388
        %434 = vmatpush.msra.mxu0 %v386
        %435 = vmatpush.msra.mxu0 %v384
        %436 = vmatpush.msra.mxu0 %v382
        %437 = vmatpush.msra.mxu0 %v380
        %438 = vmatpush.msra.mxu0 %v378
        %439 = vmatpush.msra.mxu0 %v376
        %440 = vmatpush.msra.mxu0 %v374
        %441 = vmatpush.msra.mxu0 %v372
        %442 = vmatpush.msra.mxu0 %v370
        %443 = vmatpush.msra.mxu0 %v368
        %444 = vmatmul.f32.gmra.mxu0 %v362
        %v445 = vpop.f32.mrf.mxu0
        %v446 = vadd.f32 %v402, %v445
        %447 = vmatmul.f32.gmra.mxu0 %v365
        %v448 = vpop.f32.mrf.mxu0
        %v449 = vadd.f32 %v402, %v448
        %450 = vdwg.mxu0
        %451 = vst [vmem:[%s278] sm:$0xff] %v423
        %452 = vst [vmem:[%s278 + $0x8] sm:$0xff] %v446
        %453 = vst [vmem:[%s278 + $0x10] sm:$0xff] %v426
        %454 = vst [vmem:[%s278 + $0x18] sm:$0xff] %v449
        %s455 = sand.u32 %s141, 1
        %s456 = scalar_lea.sflag [#allocation4], %s455
        %s457 = sand.u32 %s141, 1
        %s458 = smul.addr %s457, 32
        %s459 = scalar_lea.vmem [#allocation8], %s458
        // Predicated region
        $region53: #{tpu_custom_call.1} parent=39 // pred_check
          %p460 = pneg %p151
        $region54: #{tpu_custom_call.1} parent=39 // pred_check_branch
          %462 = sbr.rel (%p460) target = $region56
        $region55: #{tpu_custom_call.1} parent=39 // pred_region
          %s463 = smul.u32 2, %s23
          %465 = vsyncadd %s456, 0
          %s466 = smul.addr %s463, 2
          %s467 = smul.addr %s466, 8
          %s468 = scalar_lea.hbm %s5, %s467
          %s469 = sshll.u32 %s459, 4
          %s470 = int_to_ptr.vmem [resolvable:$true] %s469
          %s471 = sshll.u32 %s468, 4
          %s472 = int_to_ptr.hbm [resolvable:$true] %s471
          %477 = dma.vmem_to_hbm [thread:$0]  %s470, 512, %s472, %s456, 256, 256, 16
        $region56: #{tpu_custom_call.1} parent=39 // pred_fallthru
          _
      $region40: #{tpu_custom_call.1} parent=5 // pred_fallthru
        _
      %p478 = scmp.le.s32.totalorder 2, %s18
      // Predicated region
      $region57: #{tpu_custom_call.1} parent=5 // pred_check
        %p479 = pneg %p478
      $region58: #{tpu_custom_call.1} parent=5 // pred_check_branch
        %481 = sbr.rel (%p479) target = $region60
      $region59: #{tpu_custom_call.1} parent=5 // pred_region
        %s482 = ssub.s32 %s18, 2
        // Predicated region
        $region61: #{tpu_custom_call.1} parent=59 // pred_check
          %p483 = pneg %p157
        $region62: #{tpu_custom_call.1} parent=59 // pred_check_branch
          %485 = sbr.rel (%p483) target = $region64
        $region63: #{tpu_custom_call.1} parent=59 // pred_region
          %s486 = sand.u32 %s142, 1
          %s487 = scalar_lea.sflag [#allocation4], %s486
          %s488 = sand.u32 %s142, 1
          %s489 = smul.addr %s488, 32
          %s490 = scalar_lea.vmem [#allocation8], %s489
          %492 = dma.done %s487, 512
        $region64: #{tpu_custom_call.1} parent=59 // pred_fallthru
          _
      $region60: #{tpu_custom_call.1} parent=5 // pred_fallthru
        _
    $region6: #{tpu_custom_call.1} parent=1 // loop_footer
      %s22 = sadd.s32 1, %s18
    $region7: #{tpu_custom_call.1} parent=1 // loop_footer_branch
      %17 = sbr.rel target = $region3
    $region8: #{tpu_custom_call.1} parent=1 // loop_exit
      _
    %493 = vsyncpa [#allocation3], 1
    %s494 = scalar_lea.sflag [#allocation3], 1
    %495 = vsyncpa %s494, 1
    %496 = vsyncpa [#allocation6], 1
    %497 = vsyncpa [#allocation4], 1
    %s498 = scalar_lea.sflag [#allocation4], 1
    %499 = vsyncpa %s498, 1

// kernel: tpu_custom_call.1
$region0: #{tpu_custom_call.1}
  #allocation0 [shape = 'u32[]', space=smem, size = 0x4, offset = 0x4, fixed_abs, tag = 'smem constant byte address 0x4 - core index']
  #allocation1 [shape = 'u32[72,128]{1,0:T(1,128)}', space=vmem, size = 0x9000, scoped, tag = 'internal scratch']
  %s0 = inlined_call_operand.hbm [shape: f32[32,256], index: 0, kind: input, shape index: {}]
  %s1 = inlined_call_operand.hbm [shape: f32[256,128], index: 1, kind: input, shape index: {}]
  %s2 = inlined_call_operand.vmem [shape: f32[1,128], index: 2, kind: input, shape index: {}]
  %s3 = inlined_call_operand.hbm [shape: f32[128,256], index: 3, kind: input, shape index: {}]
  %s4 = inlined_call_operand.vmem [shape: f32[1,256], index: 4, kind: input, shape index: {}]
  %s5 = inlined_call_operand.hbm [shape: f32[32,256], index: 5, kind: output, shape index: {}]
  %s6 = sld [smem:[#allocation0]]
  $region65: #{tpu_custom_call.1} parent=0
    _
  %s8 = ssub.s32 1, %s6
  %s9 = scalar_select 0, %s8, %s6
  $region1: #{tpu_custom_call.1} parent=0
    #allocation2 [shape = 'u8[32768]{0}', space=vmem, size = 0x8000, scoped, tag = 'input window, operand 0']
    #allocation3 [shape = 's32[2]{0}', space=sflag, size = 0x8, scoped, tag = 'scoped memory for tpu_custom_call.1']
    #allocation4 [shape = 's32[2]{0}', space=sflag, size = 0x8, scoped, tag = 'scoped memory for tpu_custom_call.1']
    #allocation5 [shape = 'u8[131072]{0}', space=vmem, size = 0x20000, scoped, tag = 'input window, operand 1, single buffered']
    #allocation6 [shape = 's32[1]{0}', space=sflag, size = 0x4, scoped, tag = 'scoped memory for tpu_custom_call.1']
    #allocation7 [shape = 'u8[131072]{0}', space=vmem, size = 0x20000, scoped, tag = 'input window, operand 3, single buffered']
    #allocation8 [shape = 'u8[32768]{0}', space=vmem, size = 0x8000, scoped, tag = 'output window, operand 0']
    %10 = vsyncpa [#allocation3], 0
    %s11 = scalar_lea.sflag [#allocation3], 1
    %12 = vsyncpa %s11, 0
    %13 = vsyncpa [#allocation6], 0
    %14 = vsyncpa [#allocation4], 0
    %s15 = scalar_lea.sflag [#allocation4], 1
    %16 = vsyncpa %s15, 0
    loop: start=0, step=1, limit=4
    $region2: #{tpu_custom_call.1} parent=1 // loop_pre_header
      _
    $region3: #{tpu_custom_call.1} parent=1 // loop_header
      %s18 = sphi 0, %s22
      %p19 = scmp.ge.s32.totalorder %s18, 4
      %s28 = sphi 0, %s30
      %s31 = sphi 0, %s28
      %s32 = sphi 0, %s31
      %s48 = sphi 0, %s32
      %s52 = sphi 0, %s52
      %s54 = sphi 0, %s52
      %s55 = sphi 0, %s54
      %s69 = sphi 0, %s55
      %s73 = sphi 0, %s73
      %s75 = sphi 0, %s73
      %s76 = sphi 0, %s75
      %s90 = sphi 0, %s76
      %s94 = sphi 0, %s94
      %s96 = sphi 0, %s94
      %s97 = sphi 0, %s96
      %s111 = sphi 0, %s97
      %s115 = sphi 0, %s115
      %s117 = sphi 0, %s115
      %s118 = sphi 0, %s117
      %s132 = sphi 0, %s118
      %s138 = sphi 0, %s140
      %s141 = sphi 0, %s138
      %s142 = sphi 0, %s141
      %s158 = sphi 0, %s142
    $region4: #{tpu_custom_call.1} parent=1 // loop_header_branch
      %21 = sbr.rel (%p19) target = $region8
    $region5: #{tpu_custom_call.1} parent=1 // loop_body
      %s23 = ssub.s32 %s18, 1
      %s24 = ssub.s32 %s18, 2
      %s25 = sadd.s32 %s18, 1
      %s26 = ssub.s32 %s18, %s25
      %p27 = scmp.eq.s32.totalorder %s26, 0
      %s29 = sadd.s32 %s28, 1
      %s30 = scalar_select %p27, %s28, %s29
      %p33 = pneg %p27
      %p34 = scmp.eq.s32.totalorder %s18, 1
      %p35 = por %p33, %p34
      %p36 = scmp.ne.s32.totalorder %s28, %s31
      %p37 = scmp.eq.s32.totalorder %s18, 0
      %p38 = por %p36, %p37
      %p39 = scmp.ne.s32.totalorder %s28, %s31
      %p40 = scmp.eq.s32.totalorder %s23, 1
      %p41 = por %p39, %p40
      %p42 = scmp.ne.s32.totalorder %s31, %s32
      %p43 = scmp.eq.s32.totalorder %s23, 0
      %p44 = por %p42, %p43
      %p45 = scmp.ne.s32.totalorder %s31, %s32
      %p46 = scmp.eq.s32.totalorder %s24, 1
      %p47 = por %p45, %p46
      %p49 = scmp.ne.s32.totalorder %s32, %s48
      %p50 = scmp.eq.s32.totalorder %s24, 0
      %p51 = por %p49, %p50
      %s53 = sadd.s32 %s52, 1
      %p56 = scmp.eq.s32.totalorder %s18, 1
      %p57 = scmp.ne.s32.totalorder %s52, %s54
      %p58 = scmp.eq.s32.totalorder %s18, 0
      %p59 = por %p57, %p58
      %p60 = scmp.ne.s32.totalorder %s52, %s54
      %p61 = scmp.eq.s32.totalorder %s23, 1
      %p62 = por %p60, %p61
      %p63 = scmp.ne.s32.totalorder %s54, %s55
      %p64 = scmp.eq.s32.totalorder %s23, 0
      %p65 = por %p63, %p64
      %p66 = scmp.ne.s32.totalorder %s54, %s55
      %p67 = scmp.eq.s32.totalorder %s24, 1
      %p68 = por %p66, %p67
      %p70 = scmp.ne.s32.totalorder %s55, %s69
      %p71 = scmp.eq.s32.totalorder %s24, 0
      %p72 = por %p70, %p71
      %s74 = sadd.s32 %s73, 1
      %p77 = scmp.eq.s32.totalorder %s18, 1
      %p78 = scmp.ne.s32.totalorder %s73, %s75
      %p79 = scmp.eq.s32.totalorder %s18, 0
      %p80 = por %p78, %p79
      %p81 = scmp.ne.s32.totalorder %s73, %s75
      %p82 = scmp.eq.s32.totalorder %s23, 1
      %p83 = por %p81, %p82
      %p84 = scmp.ne.s32.totalorder %s75, %s76
      %p85 = scmp.eq.s32.totalorder %s23, 0
      %p86 = por %p84, %p85
      %p87 = scmp.ne.s32.totalorder %s75, %s76
      %p88 = scmp.eq.s32.totalorder %s24, 1
      %p89 = por %p87, %p88
      %p91 = scmp.ne.s32.totalorder %s76, %s90
      %p92 = scmp.eq.s32.totalorder %s24, 0
      %p93 = por %p91, %p92
      %s95 = sadd.s32 %s94, 1
      %p98 = scmp.eq.s32.totalorder %s18, 1
      %p99 = scmp.ne.s32.totalorder %s94, %s96
      %p100 = scmp.eq.s32.totalorder %s18, 0
      %p101 = por %p99, %p100
      %p102 = scmp.ne.s32.totalorder %s94, %s96
      %p103 = scmp.eq.s32.totalorder %s23, 1
      %p104 = por %p102, %p103
      %p105 = scmp.ne.s32.totalorder %s96, %s97
      %p106 = scmp.eq.s32.totalorder %s23, 0
      %p107 = por %p105, %p106
      %p108 = scmp.ne.s32.totalorder %s96, %s97
      %p109 = scmp.eq.s32.totalorder %s24, 1
      %p110 = por %p108, %p109
      %p112 = scmp.ne.s32.totalorder %s97, %s111
      %p113 = scmp.eq.s32.totalorder %s24, 0
      %p114 = por %p112, %p113
      %s116 = sadd.s32 %s115, 1
      %p119 = scmp.eq.s32.totalorder %s18, 1
      %p120 = scmp.ne.s32.totalorder %s115, %s117
      %p121 = scmp.eq.s32.totalorder %s18, 0
      %p122 = por %p120, %p121
      %p123 = scmp.ne.s32.totalorder %s115, %s117
      %p124 = scmp.eq.s32.totalorder %s23, 1
      %p125 = por %p123, %p124
      %p126 = scmp.ne.s32.totalorder %s117, %s118
      %p127 = scmp.eq.s32.totalorder %s23, 0
      %p128 = por %p126, %p127
      %p129 = scmp.ne.s32.totalorder %s117, %s118
      %p130 = scmp.eq.s32.totalorder %s24, 1
      %p131 = por %p129, %p130
      %p133 = scmp.ne.s32.totalorder %s118, %s132
      %p134 = scmp.eq.s32.totalorder %s24, 0
      %p135 = por %p133, %p134
      %s136 = ssub.s32 %s18, %s25
      %p137 = scmp.eq.s32.totalorder %s136, 0
      %s139 = sadd.s32 %s138, 1
      %s140 = scalar_select %p137, %s138, %s139
      %p143 = pneg %p137
      %p144 = scmp.eq.s32.totalorder %s18, 1
      %p145 = por %p143, %p144
      %p146 = scmp.ne.s32.totalorder %s138, %s141
      %p147 = scmp.eq.s32.totalorder %s18, 0
      %p148 = por %p146, %p147
      %p149 = scmp.ne.s32.totalorder %s138, %s141
      %p150 = scmp.eq.s32.totalorder %s23, 1
      %p151 = por %p149, %p150
      %p152 = scmp.ne.s32.totalorder %s141, %s142
      %p153 = scmp.eq.s32.totalorder %s23, 0
      %p154 = por %p152, %p153
      %p155 = scmp.ne.s32.totalorder %s141, %s142
      %p156 = scmp.eq.s32.totalorder %s24, 1
      %p157 = por %p155, %p156
      %p159 = scmp.ne.s32.totalorder %s142, %s158
      %p160 = scmp.eq.s32.totalorder %s24, 0
      %p161 = por %p159, %p160
      %p162 = scmp.le.s32.totalorder 1, %s18
      %p163 = scmp.lt.s32.totalorder %s18, 3
      %p164 = pnand %p162, %p163
      %p165 = pneg %p164
      // Predicated region
      $region9: #{tpu_custom_call.1} parent=5 // pred_check
        _
      $region10: #{tpu_custom_call.1} parent=5 // pred_check_branch
        %167 = sbr.rel (%p164) target = $region12
      $region11: #{tpu_custom_call.1} parent=5 // pred_region
        %s168 = ssub.s32 %s18, 1
        // Predicated region
        $region13: #{tpu_custom_call.1} parent=11 // pred_check
          %p169 = pneg %p65
        $region14: #{tpu_custom_call.1} parent=11 // pred_check_branch
          %171 = sbr.rel (%p169) target = $region16
        $region15: #{tpu_custom_call.1} parent=11 // pred_region
          %173 = vsyncadd [#allocation6], 0
          %s174 = sshll.u32 %s1, 4
          %s175 = int_to_ptr.hbm [resolvable:$true] %s174
          %s176 = sshll.u32 [#allocation5], 4
          %s177 = int_to_ptr.vmem [resolvable:$true] %s176
          %182 = dma.hbm_to_vmem [thread:$0]  %s175, 4096, %s177, [#allocation6], 128, 128, 8
        $region16: #{tpu_custom_call.1} parent=11 // pred_fallthru
          _
        // Predicated region
        $region17: #{tpu_custom_call.1} parent=11 // pred_check
          %p183 = pneg %p86
        $region18: #{tpu_custom_call.1} parent=11 // pred_check_branch
          %185 = sbr.rel (%p183) target = $region20
        $region19: #{tpu_custom_call.1} parent=11 // pred_region
          _
        $region20: #{tpu_custom_call.1} parent=11 // pred_fallthru
          _
        // Predicated region
        $region21: #{tpu_custom_call.1} parent=11 // pred_check
          %p186 = pneg %p107
        $region22: #{tpu_custom_call.1} parent=11 // pred_check_branch
          %188 = sbr.rel (%p186) target = $region24
        $region23: #{tpu_custom_call.1} parent=11 // pred_region
          %190 = vsyncadd [#allocation6], 0
          %s191 = sshll.u32 %s3, 4
          %s192 = int_to_ptr.hbm [resolvable:$true] %s191
          %s193 = sshll.u32 [#allocation7], 4
          %s194 = int_to_ptr.vmem [resolvable:$true] %s193
          %199 = dma.hbm_to_vmem [thread:$0]  %s192, 4096, %s194, [#allocation6], 256, 256, 16
        $region24: #{tpu_custom_call.1} parent=11 // pred_fallthru
          _
        // Predicated region
        $region25: #{tpu_custom_call.1} parent=11 // pred_check
          %p200 = pneg %p128
        $region26: #{tpu_custom_call.1} parent=11 // pred_check_branch
          %202 = sbr.rel (%p200) target = $region28
        $region27: #{tpu_custom_call.1} parent=11 // pred_region
          _
        $region28: #{tpu_custom_call.1} parent=11 // pred_fallthru
          _
      $region12: #{tpu_custom_call.1} parent=5 // pred_fallthru
        _
      %p203 = scmp.lt.s32.totalorder %s18, 2
      // Predicated region
      $region29: #{tpu_custom_call.1} parent=5 // pred_check
        %p204 = pneg %p203
      $region30: #{tpu_custom_call.1} parent=5 // pred_check_branch
        %206 = sbr.rel (%p204) target = $region32
      $region31: #{tpu_custom_call.1} parent=5 // pred_region
        // Predicated region
        $region33: #{tpu_custom_call.1} parent=31 // pred_check
          %p207 = pneg %p38
        $region34: #{tpu_custom_call.1} parent=31 // pred_check_branch
          %209 = sbr.rel (%p207) target = $region36
        $region35: #{tpu_custom_call.1} parent=31 // pred_region
          %s210 = sand.u32 %s28, 1
          %s211 = scalar_lea.sflag [#allocation3], %s210
          %s212 = sand.u32 %s28, 1
          %s213 = smul.addr %s212, 32
          %s214 = scalar_lea.vmem [#allocation2], %s213
          %s215 = smul.u32 2, %s18
          %217 = vsyncadd %s211, 0
          %s218 = smul.addr %s215, 2
          %s219 = smul.addr %s218, 8
          %s220 = scalar_lea.hbm %s0, %s219
          %s221 = sshll.u32 %s220, 4
          %s222 = int_to_ptr.hbm [resolvable:$true] %s221
          %s223 = sshll.u32 %s214, 4
          %s224 = int_to_ptr.vmem [resolvable:$true] %s223
          %229 = dma.hbm_to_vmem [thread:$0]  %s222, 512, %s224, %s211, 256, 256, 16
        $region36: #{tpu_custom_call.1} parent=31 // pred_fallthru
          _
      $region32: #{tpu_custom_call.1} parent=5 // pred_fallthru
        _
      %p230 = scmp.le.s32.totalorder 1, %s18
      %p231 = scmp.lt.s32.totalorder %s18, 3
      %p232 = pnand %p230, %p231
      %p233 = pneg %p232
      // Predicated region
      $region37: #{tpu_custom_call.1} parent=5 // pred_check
        _
      $region38: #{tpu_custom_call.1} parent=5 // pred_check_branch
        %235 = sbr.rel (%p232) target = $region40
      $region39: #{tpu_custom_call.1} parent=5 // pred_region
        %s236 = ssub.s32 %s18, 1
        %s237 = sand.u32 %s31, 1
        %s238 = scalar_lea.sflag [#allocation3], %s237
        %s239 = sand.u32 %s31, 1
        %s240 = smul.addr %s239, 32
        %s241 = scalar_lea.vmem [#allocation2], %s240
        // Predicated region
        $region41: #{tpu_custom_call.1} parent=39 // pred_check
          %p242 = pneg %p44
        $region42: #{tpu_custom_call.1} parent=39 // pred_check_branch
          %244 = sbr.rel (%p242) target = $region44
        $region43: #{tpu_custom_call.1} parent=39 // pred_region
          %246 = dma.done %s238, 512
        $region44: #{tpu_custom_call.1} parent=39 // pred_fallthru
          _
        // Predicated region
        $region45: #{tpu_custom_call.1} parent=39 // pred_check
          %p247 = pneg %p65
        $region46: #{tpu_custom_call.1} parent=39 // pred_check_branch
          %249 = sbr.rel (%p247) target = $region48
        $region47: #{tpu_custom_call.1} parent=39 // pred_region
          %251 = dma.done [#allocation6], 4096
        $region48: #{tpu_custom_call.1} parent=39 // pred_fallthru
          _
        // Predicated region
        $region49: #{tpu_custom_call.1} parent=39 // pred_check
          %p252 = pneg %p107
        $region50: #{tpu_custom_call.1} parent=39 // pred_check_branch
          %254 = sbr.rel (%p252) target = $region52
        $region51: #{tpu_custom_call.1} parent=39 // pred_region
          %256 = dma.done [#allocation6], 4096
        $region52: #{tpu_custom_call.1} parent=39 // pred_fallthru
          _
        %s257 = sand.u32 %s31, 1
        %s258 = scalar_lea.sflag [#allocation3], %s257
        %s259 = sand.u32 %s31, 1
        %s260 = smul.addr %s259, 32
        %s261 = scalar_lea.vmem [#allocation2], %s260
        %p262 = pneg %p44
        %p263 = pneg %p41
        %p264 = pneg %p65
        %p265 = pneg %p62
        %p266 = pneg %p86
        %p267 = pneg %p83
        %p268 = pneg %p107
        %p269 = pneg %p104
        %p270 = pneg %p128
        %p271 = pneg %p125
        %p272 = pneg %p154
        %p273 = pneg %p151
        %s274 = sand.u32 %s141, 1
        %s275 = scalar_lea.sflag [#allocation4], %s274
        %s276 = sand.u32 %s141, 1
        %s277 = smul.addr %s276, 32
        %s278 = scalar_lea.vmem [#allocation8], %s277
        %s279 = smul.u32 2, %s23
        %s280 = smul.u32 2, %s23
        %v281 = vld [vmem:[%s241] sm:$0xff]
        %v282 = vld [vmem:[%s241 + $0x8] sm:$0xff]
        %v283 = vld [vmem:[%s241 + $0x10] sm:$0xff]
        %v284 = vld [vmem:[%s241 + $0x18] sm:$0xff]
        %v285 = vld [vmem:[#allocation5] sm:$0xff]
        %v286 = vld [vmem:[#allocation5 + $0x8] sm:$0xff]
        %v287 = vld [vmem:[#allocation5 + $0x10] sm:$0xff]
        %v288 = vld [vmem:[#allocation5 + $0x18] sm:$0xff]
        %v289 = vld [vmem:[#allocation5 + $0x20] sm:$0xff]
        %v290 = vld [vmem:[#allocation5 + $0x28] sm:$0xff]
        %v291 = vld [vmem:[#allocation5 + $0x30] sm:$0xff]
        %v292 = vld [vmem:[#allocation5 + $0x38] sm:$0xff]
        %v293 = vld [vmem:[#allocation5 + $0x40] sm:$0xff]
        %v294 = vld [vmem:[#allocation5 + $0x48] sm:$0xff]
        %v295 = vld [vmem:[#allocation5 + $0x50] sm:$0xff]
        %v296 = vld [vmem:[#allocation5 + $0x58] sm:$0xff]
        %v297 = vld [vmem:[#allocation5 + $0x60] sm:$0xff]
        %v298 = vld [vmem:[#allocation5 + $0x68] sm:$0xff]
        %v299 = vld [vmem:[#allocation5 + $0x70] sm:$0xff]
        %v300 = vld [vmem:[#allocation5 + $0x78] sm:$0xff]
        %v301 = vld [vmem:[#allocation5 + $0x80] sm:$0xff]
        %v302 = vld [vmem:[#allocation5 + $0x88] sm:$0xff]
        %v303 = vld [vmem:[#allocation5 + $0x90] sm:$0xff]
        %v304 = vld [vmem:[#allocation5 + $0x98] sm:$0xff]
        %v305 = vld [vmem:[#allocation5 + $0xa0] sm:$0xff]
        %v306 = vld [vmem:[#allocation5 + $0xa8] sm:$0xff]
        %v307 = vld [vmem:[#allocation5 + $0xb0] sm:$0xff]
        %v308 = vld [vmem:[#allocation5 + $0xb8] sm:$0xff]
        %v309 = vld [vmem:[#allocation5 + $0xc0] sm:$0xff]
        %v310 = vld [vmem:[#allocation5 + $0xc8] sm:$0xff]
        %v311 = vld [vmem:[#allocation5 + $0xd0] sm:$0xff]
        %v312 = vld [vmem:[#allocation5 + $0xd8] sm:$0xff]
        %v313 = vld [vmem:[#allocation5 + $0xe0] sm:$0xff]
        %v314 = vld [vmem:[#allocation5 + $0xe8] sm:$0xff]
        %v315 = vld [vmem:[#allocation5 + $0xf0] sm:$0xff]
        %v316 = vld [vmem:[#allocation5 + $0xf8] sm:$0xff]
        %v317 = vld [vmem:[%s2] sm:$0x1]
        %v319 = vperm.slane %v317, 0
        %321 = vmatpush.msra.mxu0 %v300
        %322 = vmatpush.msra.mxu0 %v299
        %323 = vmatpush.msra.mxu0 %v298
        %324 = vmatpush.msra.mxu0 %v297
        %325 = vmatpush.msra.mxu0 %v296
        %326 = vmatpush.msra.mxu0 %v295
        %327 = vmatpush.msra.mxu0 %v294
        %328 = vmatpush.msra.mxu0 %v293
        %329 = vmatpush.msra.mxu0 %v292
        %330 = vmatpush.msra.mxu0 %v291
        %331 = vmatpush.msra.mxu0 %v290
        %332 = vmatpush.msra.mxu0 %v289
        %333 = vmatpush.msra.mxu0 %v288
        %334 = vmatpush.msra.mxu0 %v287
        %335 = vmatpush.msra.mxu0 %v286
        %336 = vmatpush.msra.mxu0 %v285
        %337 = vmatmul.f32.gmra.mxu0 %v281
        %v338 = vpop.f32.mrf.mxu0
        %v339 = vadd.f32 %v319, %v338
        %340 = vmatmul.f32.gmra.mxu0 %v283
        %v341 = vpop.f32.mrf.mxu0
        %v342 = vadd.f32 %v319, %v341
        %343 = vdwg.mxu0
        %344 = vmatpush.msra.mxu0 %v316
        %345 = vmatpush.msra.mxu0 %v315
        %346 = vmatpush.msra.mxu0 %v314
        %347 = vmatpush.msra.mxu0 %v313
        %348 = vmatpush.msra.mxu0 %v312
        %349 = vmatpush.msra.mxu0 %v311
        %350 = vmatpush.msra.mxu0 %v310
        %351 = vmatpush.msra.mxu0 %v309
        %352 = vmatpush.msra.mxu0 %v308
        %353 = vmatpush.msra.mxu0 %v307
        %354 = vmatpush.msra.mxu0 %v306
        %355 = vmatpush.msra.mxu0 %v305
        %356 = vmatpush.msra.mxu0 %v304
        %357 = vmatpush.msra.mxu0 %v303
        %358 = vmatpush.msra.mxu0 %v302
        %359 = vmatpush.msra.mxu0 %v301
        %360 = vmatmul.f32.gmra.mxu0 %v282
        %v361 = vpop.f32.mrf.mxu0
        %v362 = vadd.f32 %v339, %v361
        %363 = vmatmul.f32.gmra.mxu0 %v284
        %v364 = vpop.f32.mrf.mxu0
        %v365 = vadd.f32 %v342, %v364
        %366 = vdwg.mxu0
        %v367 = vld [vmem:[#allocation7] sm:$0xff]
        %v368 = vld [vmem:[#allocation7 + $0x8] sm:$0xff]
        %v369 = vld [vmem:[#allocation7 + $0x10] sm:$0xff]
        %v370 = vld [vmem:[#allocation7 + $0x18] sm:$0xff]
        %v371 = vld [vmem:[#allocation7 + $0x20] sm:$0xff]
        %v372 = vld [vmem:[#allocation7 + $0x28] sm:$0xff]
        %v373 = vld [vmem:[#allocation7 + $0x30] sm:$0xff]
        %v374 = vld [vmem:[#allocation7 + $0x38] sm:$0xff]
        %v375 = vld [vmem:[#allocation7 + $0x40] sm:$0xff]
        %v376 = vld [vmem:[#allocation7 + $0x48] sm:$0xff]
        %v377 = vld [vmem:[#allocation7 + $0x50] sm:$0xff]
        %v378 = vld [vmem:[#allocation7 + $0x58] sm:$0xff]
        %v379 = vld [vmem:[#allocation7 + $0x60] sm:$0xff]
        %v380 = vld [vmem:[#allocation7 + $0x68] sm:$0xff]
        %v381 = vld [vmem:[#allocation7 + $0x70] sm:$0xff]
        %v382 = vld [vmem:[#allocation7 + $0x78] sm:$0xff]
        %v383 = vld [vmem:[#allocation7 + $0x80] sm:$0xff]
        %v384 = vld [vmem:[#allocation7 + $0x88] sm:$0xff]
        %v385 = vld [vmem:[#allocation7 + $0x90] sm:$0xff]
        %v386 = vld [vmem:[#allocation7 + $0x98] sm:$0xff]
        %v387 = vld [vmem:[#allocation7 + $0xa0] sm:$0xff]
        %v388 = vld [vmem:[#allocation7 + $0xa8] sm:$0xff]
        %v389 = vld [vmem:[#allocation7 + $0xb0] sm:$0xff]
        %v390 = vld [vmem:[#allocation7 + $0xb8] sm:$0xff]
        %v391 = vld [vmem:[#allocation7 + $0xc0] sm:$0xff]
        %v392 = vld [vmem:[#allocation7 + $0xc8] sm:$0xff]
        %v393 = vld [vmem:[#allocation7 + $0xd0] sm:$0xff]
        %v394 = vld [vmem:[#allocation7 + $0xd8] sm:$0xff]
        %v395 = vld [vmem:[#allocation7 + $0xe0] sm:$0xff]
        %v396 = vld [vmem:[#allocation7 + $0xe8] sm:$0xff]
        %v397 = vld [vmem:[#allocation7 + $0xf0] sm:$0xff]
        %v398 = vld [vmem:[#allocation7 + $0xf8] sm:$0xff]
        %v399 = vld [vmem:[%s4] sm:$0x3]
        %v401 = vperm.slane %v399, 0
        %v402 = vperm.slane %v399, 1
        %405 = vmatpush.msra.mxu0 %v397
        %406 = vmatpush.msra.mxu0 %v395
        %407 = vmatpush.msra.mxu0 %v393
        %408 = vmatpush.msra.mxu0 %v391
        %409 = vmatpush.msra.mxu0 %v389
        %410 = vmatpush.msra.mxu0 %v387
        %411 = vmatpush.msra.mxu0 %v385
        %412 = vmatpush.msra.mxu0 %v383
        %413 = vmatpush.msra.mxu0 %v381
        %414 = vmatpush.msra.mxu0 %v379
        %415 = vmatpush.msra.mxu0 %v377
        %416 = vmatpush.msra.mxu0 %v375
        %417 = vmatpush.msra.mxu0 %v373
        %418 = vmatpush.msra.mxu0 %v371
        %419 = vmatpush.msra.mxu0 %v369
        %420 = vmatpush.msra.mxu0 %v367
        %421 = vmatmul.f32.gmra.mxu0 %v362
        %v422 = vpop.f32.mrf.mxu0
        %v423 = vadd.f32 %v401, %v422
        %424 = vmatmul.f32.gmra.mxu0 %v365
        %v425 = vpop.f32.mrf.mxu0
        %v426 = vadd.f32 %v401, %v425
        %427 = vdwg.mxu0
        %428 = vmatpush.msra.mxu0 %v398
        %429 = vmatpush.msra.mxu0 %v396
        %430 = vmatpush.msra.mxu0 %v394
        %431 = vmatpush.msra.mxu0 %v392
        %432 = vmatpush.msra.mxu0 %v390
        %433 = vmatpush.msra.mxu0 %v388
        %434 = vmatpush.msra.mxu0 %v386
        %435 = vmatpush.msra.mxu0 %v384
        %436 = vmatpush.msra.mxu0 %v382
        %437 = vmatpush.msra.mxu0 %v380
        %438 = vmatpush.msra.mxu0 %v378
        %439 = vmatpush.msra.mxu0 %v376
        %440 = vmatpush.msra.mxu0 %v374
        %441 = vmatpush.msra.mxu0 %v372
        %442 = vmatpush.msra.mxu0 %v370
        %443 = vmatpush.msra.mxu0 %v368
        %444 = vmatmul.f32.gmra.mxu0 %v362
        %v445 = vpop.f32.mrf.mxu0
        %v446 = vadd.f32 %v402, %v445
        %447 = vmatmul.f32.gmra.mxu0 %v365
        %v448 = vpop.f32.mrf.mxu0
        %v449 = vadd.f32 %v402, %v448
        %450 = vdwg.mxu0
        %451 = vst [vmem:[%s278] sm:$0xff] %v423
        %452 = vst [vmem:[%s278 + $0x8] sm:$0xff] %v446
        %453 = vst [vmem:[%s278 + $0x10] sm:$0xff] %v426
        %454 = vst [vmem:[%s278 + $0x18] sm:$0xff] %v449
        %s455 = sand.u32 %s141, 1
        %s456 = scalar_lea.sflag [#allocation4], %s455
        %s457 = sand.u32 %s141, 1
        %s458 = smul.addr %s457, 32
        %s459 = scalar_lea.vmem [#allocation8], %s458
        // Predicated region
        $region53: #{tpu_custom_call.1} parent=39 // pred_check
          %p460 = pneg %p151
        $region54: #{tpu_custom_call.1} parent=39 // pred_check_branch
          %462 = sbr.rel (%p460) target = $region56
        $region55: #{tpu_custom_call.1} parent=39 // pred_region
          %s463 = smul.u32 2, %s23
          %465 = vsyncadd %s456, 0
          %s466 = smul.addr %s463, 2
          %s467 = smul.addr %s466, 8
          %s468 = scalar_lea.hbm %s5, %s467
          %s469 = sshll.u32 %s459, 4
          %s470 = int_to_ptr.vmem [resolvable:$true] %s469
          %s471 = sshll.u32 %s468, 4
          %s472 = int_to_ptr.hbm [resolvable:$true] %s471
          %477 = dma.vmem_to_hbm [thread:$0]  %s470, 512, %s472, %s456, 256, 256, 16
        $region56: #{tpu_custom_call.1} parent=39 // pred_fallthru
          _
      $region40: #{tpu_custom_call.1} parent=5 // pred_fallthru
        _
      %p478 = scmp.le.s32.totalorder 2, %s18
      // Predicated region
      $region57: #{tpu_custom_call.1} parent=5 // pred_check
        %p479 = pneg %p478
      $region58: #{tpu_custom_call.1} parent=5 // pred_check_branch
        %481 = sbr.rel (%p479) target = $region60
      $region59: #{tpu_custom_call.1} parent=5 // pred_region
        %s482 = ssub.s32 %s18, 2
        // Predicated region
        $region61: #{tpu_custom_call.1} parent=59 // pred_check
          %p483 = pneg %p157
        $region62: #{tpu_custom_call.1} parent=59 // pred_check_branch
          %485 = sbr.rel (%p483) target = $region64
        $region63: #{tpu_custom_call.1} parent=59 // pred_region
          %s486 = sand.u32 %s142, 1
          %s487 = scalar_lea.sflag [#allocation4], %s486
          %s488 = sand.u32 %s142, 1
          %s489 = smul.addr %s488, 32
          %s490 = scalar_lea.vmem [#allocation8], %s489
          %492 = dma.done %s487, 512
        $region64: #{tpu_custom_call.1} parent=59 // pred_fallthru
          _
      $region60: #{tpu_custom_call.1} parent=5 // pred_fallthru
        _
    $region6: #{tpu_custom_call.1} parent=1 // loop_footer
      %s22 = sadd.s32 1, %s18
    $region7: #{tpu_custom_call.1} parent=1 // loop_footer_branch
      %17 = sbr.rel target = $region3
    $region8: #{tpu_custom_call.1} parent=1 // loop_exit
      _
    %493 = vsyncpa [#allocation3], 1
    %s494 = scalar_lea.sflag [#allocation3], 1
    %495 = vsyncpa %s494, 1
    %496 = vsyncpa [#allocation6], 1
    %497 = vsyncpa [#allocation4], 1
    %s498 = scalar_lea.sflag [#allocation4], 1
    %499 = vsyncpa %s498, 1

</llo_original>
